<compile_context>
chip_gen: v7x
topology: tpu7x:2x2x1
jax: 0.10.0
libtpu: 0.0.40
codegen_flags: <defaults>
</compile_context>

<pallas_src>
from functools import partial

import numpy as np
import jax
import jax.numpy as jnp
from jax.experimental import pallas as pl
from jax.experimental.pallas import tpu as pltpu


def _choose_blocks(B, C, T, itemsize,
                   target_block_bytes=2 << 20,    # ~2 MiB per block
                   vmem_budget_bytes=24 << 20,    # in+out, double-buffered (v7x-safe)
                   max_rows_per_block=16):
    """Pick (bb, tc) = (batch rows, channel rows) per grid block.

    Blocks are sized from a byte budget so the ~0.35us per-grid-step overhead
    is amortized (HBM-roofline regime needs ~1-4 MiB tiles), while the
    double-buffered in+out footprint stays under the v7x VMEM budget
    (64 MiB physical / 32 MiB default scoped).  The shift is along T only,
    so the C axis can be split with no halo; T is never split.
    """
    # ---- channel block: split C only if one full-C batch row is too big ----
    tc = C
    if C * T * itemsize > target_block_bytes:
        fits = [d for d in range(8, C, 8)
                if C % d == 0 and d * T * itemsize <= target_block_bytes]
        if fits:
            tc = max(fits)
        else:
            small = [d for d in range(8, C, 8) if C % d == 0]
            if small:
                tc = min(small)        # best we can do without splitting T
    blk_row = tc * T * itemsize

    # ---- batch block: biggest divisor of B fitting the byte/VMEM budget ----
    # (bb is also capped so the in-kernel static unroll stays small.)
    divs = [d for d in range(1, B + 1) if B % d == 0]
    fits = [d for d in divs
            if d <= max_rows_per_block
            and d * blk_row <= target_block_bytes
            and 4 * d * blk_row <= vmem_budget_bytes]
    bb = max(fits) if fits else 1

    # ---- keep >=2 steps on the parallel batch axis when it is cheap, so the
    #      work can shard across v7x's two TensorCores ----
    if B // bb < 2 and B > 1:
        alts = [d for d in divs if B // d >= 2 and d <= max_rows_per_block]
        if alts:
            alt = max(alts)
            if alt * blk_row >= target_block_bytes // 2 or bb * blk_row <= (256 << 10):
                bb = alt
    return bb, tc


def _phase_shuffle_kernel(k_ref, x_ref, o_ref, *, shift_factor, bb):
    """One grid step handles `bb` batch rows x `tc` channels x full T.

    k_ref : SMEM int32[B]       per-batch shift (scalar prefetch)
    x_ref : VMEM (bb, tc, T)    input tile (native dtype)
    o_ref : VMEM (bb, tc, T)    output tile
    """
    T = x_ref.shape[-1]
    base = pl.program_id(0) * bb

    # Hoisted once per grid step: lane-index iota and static edge-lane masks.
    lane = jax.lax.broadcasted_iota(jnp.int32, x_ref.shape[1:], 1)
    lmask = [lane == e for e in range(shift_factor)]
    rmask = [lane == (T - 1 - e) for e in range(shift_factor)]

    for i in range(bb):                       # static unroll; bb is kept small
        k = k_ref[base + i]                   # dynamic scalar in [-n, n]

        @pl.when(k == 0)
        def _copy(i=i):                       # zero-shift rows: straight copy
            o_ref[i] = x_ref[i]

        @pl.when(k != 0)
        def _shift(i=i, k=k):
            x = x_ref[i]                      # (tc, T), native dtype
            # Interior: out[j] = x[j - k]  -- one dynamic XLU lane rotate.
            out = pltpu.roll(x, jnp.mod(k, T), axis=1)
            # Edge fix-up: only the <= shift_factor wrapped lanes per side are
            # wrong; patch each with its reflected source via another roll.
            for e in range(shift_factor):
                # Left lane e (active when k > e) needs x[k - e].
                fix_l = pltpu.roll(x, jnp.mod(2 * e - k, T), axis=1)
                out = jnp.where((k > e) & lmask[e], fix_l, out)
                # Right lane T-1-e (active when k < -e) needs x[T-1+e+k].
                fix_r = pltpu.roll(x, jnp.mod(-2 * e - k, T), axis=1)
                out = jnp.where((k < -e) & rmask[e], fix_r, out)
            o_ref[i] = out


def phase_shuffle(x, k_list, shift_factor):
    """Apply per-batch phase shuffle with reflection padding."""
    B, C, T = x.shape
    if shift_factor == 0:
        return x
    if 2 * shift_factor >= T:
        raise ValueError(
            f"shift_factor={shift_factor} too large for T={T}: reflect padding "
            f"requires 2*shift_factor < T.")

    itemsize = jnp.dtype(x.dtype).itemsize
    bb, tc = _choose_blocks(B, C, T, itemsize)
    block_bytes = bb * tc * T * itemsize
    # Raise the scoped VMEM limit so byte-budget blocks can double-buffer
    # (v5e default 16 MiB, v6e/v7x 32 MiB); cap at v7x's 64 MiB physical.
    vmem_limit = int(min(64 << 20, max(32 << 20, 4 * block_bytes + (8 << 20))))

    k_list = k_list.astype(jnp.int32)
    kernel = partial(_phase_shuffle_kernel, shift_factor=shift_factor, bb=bb)
    total_bytes = B * C * T * itemsize

    return pl.pallas_call(
        kernel,
        out_shape=jax.ShapeDtypeStruct((B, C, T), x.dtype),
        grid_spec=pltpu.PrefetchScalarGridSpec(
            num_scalar_prefetch=1,
            grid=(B // bb, C // tc),
            in_specs=[pl.BlockSpec((bb, tc, T), lambda b, c, k: (b, c, 0))],
            out_specs=pl.BlockSpec((bb, tc, T), lambda b, c, k: (b, c, 0)),
        ),
        compiler_params=pltpu.CompilerParams(
            dimension_semantics=("parallel", "parallel"),
            vmem_limit_bytes=vmem_limit),
        cost_estimate=pl.CostEstimate(
            flops=0, transcendentals=0, bytes_accessed=2 * total_bytes),
    )(k_list, x)


class PhaseShuffle:
    """JAX/Pallas port of the PyTorch PhaseShuffle module."""

    def __init__(self, shift_factor):
        self.shift_factor = shift_factor

    def __call__(self, x, key):
        if self.shift_factor == 0:
            return x
        B = x.shape[0]
        # Mirrors torch.Tensor(B).random_(0, 2n+1) - n, but deterministic.
        k_list = (jax.random.randint(key, (B,), 0, 2 * self.shift_factor + 1)
                  - self.shift_factor)
        return phase_shuffle(x, k_list, self.shift_factor)


def _reference(x, k_list):
    """NumPy reference replicating the PyTorch F.pad(..., mode='reflect') path."""
    x = np.asarray(x)
    out = np.empty_like(x)
    T = x.shape[-1]
    for b, k in enumerate(np.asarray(k_list)):
        k = int(k)
        if k > 0:
            out[b] = np.pad(x[b][..., :T - k], ((0, 0), (k, 0)), mode="reflect")
        elif k < 0:
            out[b] = np.pad(x[b][..., -k:], ((0, 0), (0, -k)), mode="reflect")
        else:
            out[b] = x[b]
    return out


if __name__ == "__main__":
    shift_factor = 2
    B, C, T = 6, 8, 128

    root = jax.random.PRNGKey(0)
    kx, kk = jax.random.split(root)
    x = jax.random.normal(kx, (B, C, T), dtype=jnp.float32)

    # Deterministic shifts covering every case (-n..n) plus a zero repeat
    # (exercises the pl.when fast path).
    k_list = jnp.array([-2, -1, 0, 1, 2, 0], dtype=jnp.int32)

    out = jax.block_until_ready(phase_shuffle(x, k_list, shift_factor))
    ref = _reference(x, k_list)
    np.testing.assert_allclose(np.asarray(out), ref, rtol=1e-6, atol=0.0)

    # Module-style wrapper with a random key.
    ps = PhaseShuffle(shift_factor)
    out2 = jax.block_until_ready(ps(x, kk))
    assert out2.shape == x.shape

    # Sanity-check the block chooser invariants on realistic WaveGAN shapes
    # (no TPU work; just divisibility / budget checks).
    for (bB, bC, bT) in [(64, 64, 16384), (64, 256, 256), (64, 1024, 16)]:
        bb_, tc_ = _choose_blocks(bB, bC, bT, 4)
        assert bB % bb_ == 0 and bC % tc_ == 0
        assert (tc_ == bC) or (tc_ % 8 == 0)

    print("KERNEL_OK")
</pallas_src>

<mosaic_0001>
module attributes {stable_mosaic.version = 11 : i64} {
  func.func @_phase_shuffle_kernel(%arg0: i32, %arg1: i32, %arg2: memref<6xi32, #tpu.memory_space<smem>>, %arg3: memref<3x8x128xf32, #tpu.memory_space<vmem>>, %arg4: memref<3x8x128xf32, #tpu.memory_space<vmem>>) attributes {dimension_semantics = [#tpu.dimension_semantics<parallel>, #tpu.dimension_semantics<parallel>], iteration_bounds = array<i64: 2, 1>, scalar_prefetch = 1 : i64, scratch_operands = 0 : i64, tpu.core_type = #tpu.core_type<tc>, window_params = [{transform_indices = @transform_0, window_bounds = array<i64: 3, 8, 128>}, {transform_indices = @transform_1, window_bounds = array<i64: 3, 8, 128>}]} {
    %c3_i32 = arith.constant 3 : i32
    %0 = arith.muli %arg0, %c3_i32 : i32
    %1 = tpu.iota {dimensions = array<i32: 1>} : vector<8x128xi32>
    %c0_i32 = arith.constant 0 : i32
    %2 = vector.broadcast %c0_i32 : i32 to vector<8x128xi32>
    %3 = arith.cmpi eq, %1, %2 : vector<8x128xi32>
    %c1_i32 = arith.constant 1 : i32
    %4 = vector.broadcast %c1_i32 : i32 to vector<8x128xi32>
    %5 = arith.cmpi eq, %1, %4 : vector<8x128xi32>
    %c127_i32 = arith.constant 127 : i32
    %6 = vector.broadcast %c127_i32 : i32 to vector<8x128xi32>
    %7 = arith.cmpi eq, %1, %6 : vector<8x128xi32>
    %c126_i32 = arith.constant 126 : i32
    %8 = vector.broadcast %c126_i32 : i32 to vector<8x128xi32>
    %9 = arith.cmpi eq, %1, %8 : vector<8x128xi32>
    %c0_i32_0 = arith.constant 0 : i32
    %10 = arith.addi %0, %c0_i32_0 : i32
    %11 = arith.index_cast %10 : i32 to index
    %12 = memref.load %arg2[%11] : memref<6xi32, #tpu.memory_space<smem>>
    %c0_i32_1 = arith.constant 0 : i32
    %13 = arith.cmpi eq, %12, %c0_i32_1 : i32
    %14 = arith.extui %13 : i1 to i32
    %c0_i32_2 = arith.constant 0 : i32
    %15 = arith.cmpi ne, %14, %c0_i32_2 : i32
    scf.if %15 {
      %c0 = arith.constant 0 : index
      %c0_14 = arith.constant 0 : index
      %c0_15 = arith.constant 0 : index
      %37 = vector.load %arg3[%c0, %c0_14, %c0_15] : memref<3x8x128xf32, #tpu.memory_space<vmem>>, vector<1x8x128xf32>
      %38 = vector.shape_cast %37 : vector<1x8x128xf32> to vector<8x128xf32>
      %c0_16 = arith.constant 0 : index
      %c0_17 = arith.constant 0 : index
      %c0_18 = arith.constant 0 : index
      %39 = vector.load %arg4[%c0_16, %c0_17, %c0_18] : memref<3x8x128xf32, #tpu.memory_space<vmem>>, vector<1x8x128xf32>
      %40 = vector.shape_cast %39 : vector<1x8x128xf32> to vector<8x128xf32>
      %41 = vector.shape_cast %38 : vector<8x128xf32> to vector<1x8x128xf32>
      tpu.vector_store %arg4[%c0_16, %c0_17, %c0_18], %41 {strides = array<i32>} : memref<3x8x128xf32, #tpu.memory_space<vmem>>, vector<1x8x128xf32>,
    } else {
    }
    %c0_i32_3 = arith.constant 0 : i32
    %16 = arith.cmpi ne, %12, %c0_i32_3 : i32
    %17 = arith.extui %16 : i1 to i32
    %c0_i32_4 = arith.constant 0 : i32
    %18 = arith.cmpi ne, %17, %c0_i32_4 : i32
    scf.if %18 {
      %c0 = arith.constant 0 : index
      %c0_14 = arith.constant 0 : index
      %c0_15 = arith.constant 0 : index
      %37 = vector.load %arg3[%c0, %c0_14, %c0_15] : memref<3x8x128xf32, #tpu.memory_space<vmem>>, vector<1x8x128xf32>
      %38 = vector.shape_cast %37 : vector<1x8x128xf32> to vector<8x128xf32>
      %c128_i32 = arith.constant 128 : i32
      %c0_i32_16 = arith.constant 0 : i32
      %39 = arith.cmpi eq, %c128_i32, %c0_i32_16 : i32
      %c1_i32_17 = arith.constant 1 : i32
      %40 = arith.select %39, %c1_i32_17, %c128_i32 : i32
      %41 = arith.remsi %12, %40 : i32
      %c0_i32_18 = arith.constant 0 : i32
      %42 = arith.cmpi ne, %41, %c0_i32_18 : i32
      %c0_i32_19 = arith.constant 0 : i32
      %43 = arith.cmpi slt, %41, %c0_i32_19 : i32
      %c0_i32_20 = arith.constant 0 : i32
      %44 = arith.cmpi slt, %40, %c0_i32_20 : i32
      %45 = arith.xori %43, %44 : i1
      %46 = arith.andi %45, %42 : i1
      %47 = arith.addi %41, %40 : i32
      %48 = arith.select %46, %47, %41 : i32
      %49 = tpu.dynamic_rotate %38 by %48 dim 1 : vector<8x128xf32>, i32 -> vector<8x128xf32>
      %c0_i32_21 = arith.constant 0 : i32
      %50 = arith.subi %c0_i32_21, %12 : i32
      %c128_i32_22 = arith.constant 128 : i32
      %c0_i32_23 = arith.constant 0 : i32
      %51 = arith.cmpi eq, %c128_i32_22, %c0_i32_23 : i32
      %c1_i32_24 = arith.constant 1 : i32
      %52 = arith.select %51, %c1_i32_24, %c128_i32_22 : i32
      %53 = arith.remsi %50, %52 : i32
      %c0_i32_25 = arith.constant 0 : i32
      %54 = arith.cmpi ne, %53, %c0_i32_25 : i32
      %c0_i32_26 = arith.constant 0 : i32
      %55 = arith.cmpi slt, %53, %c0_i32_26 : i32
      %c0_i32_27 = arith.constant 0 : i32
      %56 = arith.cmpi slt, %52, %c0_i32_27 : i32
      %57 = arith.xori %55, %56 : i1
      %58 = arith.andi %57, %54 : i1
      %59 = arith.addi %53, %52 : i32
      %60 = arith.select %58, %59, %53 : i32
      %61 = tpu.dynamic_rotate %38 by %60 dim 1 : vector<8x128xf32>, i32 -> vector<8x128xf32>
      %c0_i32_28 = arith.constant 0 : i32
      %62 = arith.cmpi sgt, %12, %c0_i32_28 : i32
      %63 = vector.broadcast %62 : i1 to vector<8x128xi1>
      %64 = arith.andi %63, %3 : vector<8x128xi1>
      %65 = arith.select %64, %61, %49 : vector<8x128xi1>, vector<8x128xf32>
      %c0_i32_29 = arith.constant 0 : i32
      %66 = arith.subi %c0_i32_29, %12 : i32
      %c128_i32_30 = arith.constant 128 : i32
      %c0_i32_31 = arith.constant 0 : i32
      %67 = arith.cmpi eq, %c128_i32_30, %c0_i32_31 : i32
      %c1_i32_32 = arith.constant 1 : i32
      %68 = arith.select %67, %c1_i32_32, %c128_i32_30 : i32
      %69 = arith.remsi %66, %68 : i32
      %c0_i32_33 = arith.constant 0 : i32
      %70 = arith.cmpi ne, %69, %c0_i32_33 : i32
      %c0_i32_34 = arith.constant 0 : i32
      %71 = arith.cmpi slt, %69, %c0_i32_34 : i32
      %c0_i32_35 = arith.constant 0 : i32
      %72 = arith.cmpi slt, %68, %c0_i32_35 : i32
      %73 = arith.xori %71, %72 : i1
      %74 = arith.andi %73, %70 : i1
      %75 = arith.addi %69, %68 : i32
      %76 = arith.select %74, %75, %69 : i32
      %77 = tpu.dynamic_rotate %38 by %76 dim 1 : vector<8x128xf32>, i32 -> vector<8x128xf32>
      %c0_i32_36 = arith.constant 0 : i32
      %78 = arith.cmpi slt, %12, %c0_i32_36 : i32
      %79 = vector.broadcast %78 : i1 to vector<8x128xi1>
      %80 = arith.andi %79, %7 : vector<8x128xi1>
      %81 = arith.select %80, %77, %65 : vector<8x128xi1>, vector<8x128xf32>
      %c2_i32_37 = arith.constant 2 : i32
      %82 = arith.subi %c2_i32_37, %12 : i32
      %c128_i32_38 = arith.constant 128 : i32
      %c0_i32_39 = arith.constant 0 : i32
      %83 = arith.cmpi eq, %c128_i32_38, %c0_i32_39 : i32
      %c1_i32_40 = arith.constant 1 : i32
      %84 = arith.select %83, %c1_i32_40, %c128_i32_38 : i32
      %85 = arith.remsi %82, %84 : i32
      %c0_i32_41 = arith.constant 0 : i32
      %86 = arith.cmpi ne, %85, %c0_i32_41 : i32
      %c0_i32_42 = arith.constant 0 : i32
      %87 = arith.cmpi slt, %85, %c0_i32_42 : i32
      %c0_i32_43 = arith.constant 0 : i32
      %88 = arith.cmpi slt, %84, %c0_i32_43 : i32
      %89 = arith.xori %87, %88 : i1
      %90 = arith.andi %89, %86 : i1
      %91 = arith.addi %85, %84 : i32
      %92 = arith.select %90, %91, %85 : i32
      %93 = tpu.dynamic_rotate %38 by %92 dim 1 : vector<8x128xf32>, i32 -> vector<8x128xf32>
      %c1_i32_44 = arith.constant 1 : i32
      %94 = arith.cmpi sgt, %12, %c1_i32_44 : i32
      %95 = vector.broadcast %94 : i1 to vector<8x128xi1>
      %96 = arith.andi %95, %5 : vector<8x128xi1>
      %97 = arith.select %96, %93, %81 : vector<8x128xi1>, vector<8x128xf32>
      %c-2_i32 = arith.constant -2 : i32
      %98 = arith.subi %c-2_i32, %12 : i32
      %c128_i32_45 = arith.constant 128 : i32
      %c0_i32_46 = arith.constant 0 : i32
      %99 = arith.cmpi eq, %c128_i32_45, %c0_i32_46 : i32
      %c1_i32_47 = arith.constant 1 : i32
      %100 = arith.select %99, %c1_i32_47, %c128_i32_45 : i32
      %101 = arith.remsi %98, %100 : i32
      %c0_i32_48 = arith.constant 0 : i32
      %102 = arith.cmpi ne, %101, %c0_i32_48 : i32
      %c0_i32_49 = arith.constant 0 : i32
      %103 = arith.cmpi slt, %101, %c0_i32_49 : i32
      %c0_i32_50 = arith.constant 0 : i32
      %104 = arith.cmpi slt, %100, %c0_i32_50 : i32
      %105 = arith.xori %103, %104 : i1
      %106 = arith.andi %105, %102 : i1
      %107 = arith.addi %101, %100 : i32
      %108 = arith.select %106, %107, %101 : i32
      %109 = tpu.dynamic_rotate %38 by %108 dim 1 : vector<8x128xf32>, i32 -> vector<8x128xf32>
      %c-1_i32 = arith.constant -1 : i32
      %110 = arith.cmpi slt, %12, %c-1_i32 : i32
      %111 = vector.broadcast %110 : i1 to vector<8x128xi1>
      %112 = arith.andi %111, %9 : vector<8x128xi1>
      %113 = arith.select %112, %109, %97 : vector<8x128xi1>, vector<8x128xf32>
      %c0_51 = arith.constant 0 : index
      %c0_52 = arith.constant 0 : index
      %c0_53 = arith.constant 0 : index
      %114 = vector.load %arg4[%c0_51, %c0_52, %c0_53] : memref<3x8x128xf32, #tpu.memory_space<vmem>>, vector<1x8x128xf32>
      %115 = vector.shape_cast %114 : vector<1x8x128xf32> to vector<8x128xf32>
      %116 = vector.shape_cast %113 : vector<8x128xf32> to vector<1x8x128xf32>
      tpu.vector_store %arg4[%c0_51, %c0_52, %c0_53], %116 {strides = array<i32>} : memref<3x8x128xf32, #tpu.memory_space<vmem>>, vector<1x8x128xf32>,
    } else {
    }
    %c1_i32_5 = arith.constant 1 : i32
    %19 = arith.addi %0, %c1_i32_5 : i32
    %20 = arith.index_cast %19 : i32 to index
    %21 = memref.load %arg2[%20] : memref<6xi32, #tpu.memory_space<smem>>
    %c0_i32_6 = arith.constant 0 : i32
    %22 = arith.cmpi eq, %21, %c0_i32_6 : i32
    %23 = arith.extui %22 : i1 to i32
    %c0_i32_7 = arith.constant 0 : i32
    %24 = arith.cmpi ne, %23, %c0_i32_7 : i32
    scf.if %24 {
      %c1 = arith.constant 1 : index
      %c0 = arith.constant 0 : index
      %c0_14 = arith.constant 0 : index
      %37 = vector.load %arg3[%c1, %c0, %c0_14] : memref<3x8x128xf32, #tpu.memory_space<vmem>>, vector<1x8x128xf32>
      %38 = vector.shape_cast %37 : vector<1x8x128xf32> to vector<8x128xf32>
      %c1_15 = arith.constant 1 : index
      %c0_16 = arith.constant 0 : index
      %c0_17 = arith.constant 0 : index
      %39 = vector.load %arg4[%c1_15, %c0_16, %c0_17] : memref<3x8x128xf32, #tpu.memory_space<vmem>>, vector<1x8x128xf32>
      %40 = vector.shape_cast %39 : vector<1x8x128xf32> to vector<8x128xf32>
      %41 = vector.shape_cast %38 : vector<8x128xf32> to vector<1x8x128xf32>
      tpu.vector_store %arg4[%c1_15, %c0_16, %c0_17], %41 {strides = array<i32>} : memref<3x8x128xf32, #tpu.memory_space<vmem>>, vector<1x8x128xf32>,
    } else {
    }
    %c0_i32_8 = arith.constant 0 : i32
    %25 = arith.cmpi ne, %21, %c0_i32_8 : i32
    %26 = arith.extui %25 : i1 to i32
    %c0_i32_9 = arith.constant 0 : i32
    %27 = arith.cmpi ne, %26, %c0_i32_9 : i32
    scf.if %27 {
      %c1 = arith.constant 1 : index
      %c0 = arith.constant 0 : index
      %c0_14 = arith.constant 0 : index
      %37 = vector.load %arg3[%c1, %c0, %c0_14] : memref<3x8x128xf32, #tpu.memory_space<vmem>>, vector<1x8x128xf32>
      %38 = vector.shape_cast %37 : vector<1x8x128xf32> to vector<8x128xf32>
      %c128_i32 = arith.constant 128 : i32
      %c0_i32_15 = arith.constant 0 : i32
      %39 = arith.cmpi eq, %c128_i32, %c0_i32_15 : i32
      %c1_i32_16 = arith.constant 1 : i32
      %40 = arith.select %39, %c1_i32_16, %c128_i32 : i32
      %41 = arith.remsi %21, %40 : i32
      %c0_i32_17 = arith.constant 0 : i32
      %42 = arith.cmpi ne, %41, %c0_i32_17 : i32
      %c0_i32_18 = arith.constant 0 : i32
      %43 = arith.cmpi slt, %41, %c0_i32_18 : i32
      %c0_i32_19 = arith.constant 0 : i32
      %44 = arith.cmpi slt, %40, %c0_i32_19 : i32
      %45 = arith.xori %43, %44 : i1
      %46 = arith.andi %45, %42 : i1
      %47 = arith.addi %41, %40 : i32
      %48 = arith.select %46, %47, %41 : i32
      %49 = tpu.dynamic_rotate %38 by %48 dim 1 : vector<8x128xf32>, i32 -> vector<8x128xf32>
      %c0_i32_20 = arith.constant 0 : i32
      %50 = arith.subi %c0_i32_20, %21 : i32
      %c128_i32_21 = arith.constant 128 : i32
      %c0_i32_22 = arith.constant 0 : i32
      %51 = arith.cmpi eq, %c128_i32_21, %c0_i32_22 : i32
      %c1_i32_23 = arith.constant 1 : i32
      %52 = arith.select %51, %c1_i32_23, %c128_i32_21 : i32
      %53 = arith.remsi %50, %52 : i32
      %c0_i32_24 = arith.constant 0 : i32
      %54 = arith.cmpi ne, %53, %c0_i32_24 : i32
      %c0_i32_25 = arith.constant 0 : i32
      %55 = arith.cmpi slt, %53, %c0_i32_25 : i32
      %c0_i32_26 = arith.constant 0 : i32
      %56 = arith.cmpi slt, %52, %c0_i32_26 : i32
      %57 = arith.xori %55, %56 : i1
      %58 = arith.andi %57, %54 : i1
      %59 = arith.addi %53, %52 : i32
      %60 = arith.select %58, %59, %53 : i32
      %61 = tpu.dynamic_rotate %38 by %60 dim 1 : vector<8x128xf32>, i32 -> vector<8x128xf32>
      %c0_i32_27 = arith.constant 0 : i32
      %62 = arith.cmpi sgt, %21, %c0_i32_27 : i32
      %63 = vector.broadcast %62 : i1 to vector<8x128xi1>
      %64 = arith.andi %63, %3 : vector<8x128xi1>
      %65 = arith.select %64, %61, %49 : vector<8x128xi1>, vector<8x128xf32>
      %c0_i32_28 = arith.constant 0 : i32
      %66 = arith.subi %c0_i32_28, %21 : i32
      %c128_i32_29 = arith.constant 128 : i32
      %c0_i32_30 = arith.constant 0 : i32
      %67 = arith.cmpi eq, %c128_i32_29, %c0_i32_30 : i32
      %c1_i32_31 = arith.constant 1 : i32
      %68 = arith.select %67, %c1_i32_31, %c128_i32_29 : i32
      %69 = arith.remsi %66, %68 : i32
      %c0_i32_32 = arith.constant 0 : i32
      %70 = arith.cmpi ne, %69, %c0_i32_32 : i32
      %c0_i32_33 = arith.constant 0 : i32
      %71 = arith.cmpi slt, %69, %c0_i32_33 : i32
      %c0_i32_34 = arith.constant 0 : i32
      %72 = arith.cmpi slt, %68, %c0_i32_34 : i32
      %73 = arith.xori %71, %72 : i1
      %74 = arith.andi %73, %70 : i1
      %75 = arith.addi %69, %68 : i32
      %76 = arith.select %74, %75, %69 : i32
      %77 = tpu.dynamic_rotate %38 by %76 dim 1 : vector<8x128xf32>, i32 -> vector<8x128xf32>
      %c0_i32_35 = arith.constant 0 : i32
      %78 = arith.cmpi slt, %21, %c0_i32_35 : i32
      %79 = vector.broadcast %78 : i1 to vector<8x128xi1>
      %80 = arith.andi %79, %7 : vector<8x128xi1>
      %81 = arith.select %80, %77, %65 : vector<8x128xi1>, vector<8x128xf32>
      %c2_i32_36 = arith.constant 2 : i32
      %82 = arith.subi %c2_i32_36, %21 : i32
      %c128_i32_37 = arith.constant 128 : i32
      %c0_i32_38 = arith.constant 0 : i32
      %83 = arith.cmpi eq, %c128_i32_37, %c0_i32_38 : i32
      %c1_i32_39 = arith.constant 1 : i32
      %84 = arith.select %83, %c1_i32_39, %c128_i32_37 : i32
      %85 = arith.remsi %82, %84 : i32
      %c0_i32_40 = arith.constant 0 : i32
      %86 = arith.cmpi ne, %85, %c0_i32_40 : i32
      %c0_i32_41 = arith.constant 0 : i32
      %87 = arith.cmpi slt, %85, %c0_i32_41 : i32
      %c0_i32_42 = arith.constant 0 : i32
      %88 = arith.cmpi slt, %84, %c0_i32_42 : i32
      %89 = arith.xori %87, %88 : i1
      %90 = arith.andi %89, %86 : i1
      %91 = arith.addi %85, %84 : i32
      %92 = arith.select %90, %91, %85 : i32
      %93 = tpu.dynamic_rotate %38 by %92 dim 1 : vector<8x128xf32>, i32 -> vector<8x128xf32>
      %c1_i32_43 = arith.constant 1 : i32
      %94 = arith.cmpi sgt, %21, %c1_i32_43 : i32
      %95 = vector.broadcast %94 : i1 to vector<8x128xi1>
      %96 = arith.andi %95, %5 : vector<8x128xi1>
      %97 = arith.select %96, %93, %81 : vector<8x128xi1>, vector<8x128xf32>
      %c-2_i32 = arith.constant -2 : i32
      %98 = arith.subi %c-2_i32, %21 : i32
      %c128_i32_44 = arith.constant 128 : i32
      %c0_i32_45 = arith.constant 0 : i32
      %99 = arith.cmpi eq, %c128_i32_44, %c0_i32_45 : i32
      %c1_i32_46 = arith.constant 1 : i32
      %100 = arith.select %99, %c1_i32_46, %c128_i32_44 : i32
      %101 = arith.remsi %98, %100 : i32
      %c0_i32_47 = arith.constant 0 : i32
      %102 = arith.cmpi ne, %101, %c0_i32_47 : i32
      %c0_i32_48 = arith.constant 0 : i32
      %103 = arith.cmpi slt, %101, %c0_i32_48 : i32
      %c0_i32_49 = arith.constant 0 : i32
      %104 = arith.cmpi slt, %100, %c0_i32_49 : i32
      %105 = arith.xori %103, %104 : i1
      %106 = arith.andi %105, %102 : i1
      %107 = arith.addi %101, %100 : i32
      %108 = arith.select %106, %107, %101 : i32
      %109 = tpu.dynamic_rotate %38 by %108 dim 1 : vector<8x128xf32>, i32 -> vector<8x128xf32>
      %c-1_i32 = arith.constant -1 : i32
      %110 = arith.cmpi slt, %21, %c-1_i32 : i32
      %111 = vector.broadcast %110 : i1 to vector<8x128xi1>
      %112 = arith.andi %111, %9 : vector<8x128xi1>
      %113 = arith.select %112, %109, %97 : vector<8x128xi1>, vector<8x128xf32>
      %c1_50 = arith.constant 1 : index
      %c0_51 = arith.constant 0 : index
      %c0_52 = arith.constant 0 : index
      %114 = vector.load %arg4[%c1_50, %c0_51, %c0_52] : memref<3x8x128xf32, #tpu.memory_space<vmem>>, vector<1x8x128xf32>
      %115 = vector.shape_cast %114 : vector<1x8x128xf32> to vector<8x128xf32>
      %116 = vector.shape_cast %113 : vector<8x128xf32> to vector<1x8x128xf32>
      tpu.vector_store %arg4[%c1_50, %c0_51, %c0_52], %116 {strides = array<i32>} : memref<3x8x128xf32, #tpu.memory_space<vmem>>, vector<1x8x128xf32>,
    } else {
    }
    %c2_i32 = arith.constant 2 : i32
    %28 = arith.addi %0, %c2_i32 : i32
    %29 = arith.index_cast %28 : i32 to index
    %30 = memref.load %arg2[%29] : memref<6xi32, #tpu.memory_space<smem>>
    %c0_i32_10 = arith.constant 0 : i32
    %31 = arith.cmpi eq, %30, %c0_i32_10 : i32
    %32 = arith.extui %31 : i1 to i32
    %c0_i32_11 = arith.constant 0 : i32
    %33 = arith.cmpi ne, %32, %c0_i32_11 : i32
    scf.if %33 {
      %c2 = arith.constant 2 : index
      %c0 = arith.constant 0 : index
      %c0_14 = arith.constant 0 : index
      %37 = vector.load %arg3[%c2, %c0, %c0_14] : memref<3x8x128xf32, #tpu.memory_space<vmem>>, vector<1x8x128xf32>
      %38 = vector.shape_cast %37 : vector<1x8x128xf32> to vector<8x128xf32>
      %c2_15 = arith.constant 2 : index
      %c0_16 = arith.constant 0 : index
      %c0_17 = arith.constant 0 : index
      %39 = vector.load %arg4[%c2_15, %c0_16, %c0_17] : memref<3x8x128xf32, #tpu.memory_space<vmem>>, vector<1x8x128xf32>
      %40 = vector.shape_cast %39 : vector<1x8x128xf32> to vector<8x128xf32>
      %41 = vector.shape_cast %38 : vector<8x128xf32> to vector<1x8x128xf32>
      tpu.vector_store %arg4[%c2_15, %c0_16, %c0_17], %41 {strides = array<i32>} : memref<3x8x128xf32, #tpu.memory_space<vmem>>, vector<1x8x128xf32>,
    } else {
    }
    %c0_i32_12 = arith.constant 0 : i32
    %34 = arith.cmpi ne, %30, %c0_i32_12 : i32
    %35 = arith.extui %34 : i1 to i32
    %c0_i32_13 = arith.constant 0 : i32
    %36 = arith.cmpi ne, %35, %c0_i32_13 : i32
    scf.if %36 {
      %c2 = arith.constant 2 : index
      %c0 = arith.constant 0 : index
      %c0_14 = arith.constant 0 : index
      %37 = vector.load %arg3[%c2, %c0, %c0_14] : memref<3x8x128xf32, #tpu.memory_space<vmem>>, vector<1x8x128xf32>
      %38 = vector.shape_cast %37 : vector<1x8x128xf32> to vector<8x128xf32>
      %c128_i32 = arith.constant 128 : i32
      %c0_i32_15 = arith.constant 0 : i32
      %39 = arith.cmpi eq, %c128_i32, %c0_i32_15 : i32
      %c1_i32_16 = arith.constant 1 : i32
      %40 = arith.select %39, %c1_i32_16, %c128_i32 : i32
      %41 = arith.remsi %30, %40 : i32
      %c0_i32_17 = arith.constant 0 : i32
      %42 = arith.cmpi ne, %41, %c0_i32_17 : i32
      %c0_i32_18 = arith.constant 0 : i32
      %43 = arith.cmpi slt, %41, %c0_i32_18 : i32
      %c0_i32_19 = arith.constant 0 : i32
      %44 = arith.cmpi slt, %40, %c0_i32_19 : i32
      %45 = arith.xori %43, %44 : i1
      %46 = arith.andi %45, %42 : i1
      %47 = arith.addi %41, %40 : i32
      %48 = arith.select %46, %47, %41 : i32
      %49 = tpu.dynamic_rotate %38 by %48 dim 1 : vector<8x128xf32>, i32 -> vector<8x128xf32>
      %c0_i32_20 = arith.constant 0 : i32
      %50 = arith.subi %c0_i32_20, %30 : i32
      %c128_i32_21 = arith.constant 128 : i32
      %c0_i32_22 = arith.constant 0 : i32
      %51 = arith.cmpi eq, %c128_i32_21, %c0_i32_22 : i32
      %c1_i32_23 = arith.constant 1 : i32
      %52 = arith.select %51, %c1_i32_23, %c128_i32_21 : i32
      %53 = arith.remsi %50, %52 : i32
      %c0_i32_24 = arith.constant 0 : i32
      %54 = arith.cmpi ne, %53, %c0_i32_24 : i32
      %c0_i32_25 = arith.constant 0 : i32
      %55 = arith.cmpi slt, %53, %c0_i32_25 : i32
      %c0_i32_26 = arith.constant 0 : i32
      %56 = arith.cmpi slt, %52, %c0_i32_26 : i32
      %57 = arith.xori %55, %56 : i1
      %58 = arith.andi %57, %54 : i1
      %59 = arith.addi %53, %52 : i32
      %60 = arith.select %58, %59, %53 : i32
      %61 = tpu.dynamic_rotate %38 by %60 dim 1 : vector<8x128xf32>, i32 -> vector<8x128xf32>
      %c0_i32_27 = arith.constant 0 : i32
      %62 = arith.cmpi sgt, %30, %c0_i32_27 : i32
      %63 = vector.broadcast %62 : i1 to vector<8x128xi1>
      %64 = arith.andi %63, %3 : vector<8x128xi1>
      %65 = arith.select %64, %61, %49 : vector<8x128xi1>, vector<8x128xf32>
      %c0_i32_28 = arith.constant 0 : i32
      %66 = arith.subi %c0_i32_28, %30 : i32
      %c128_i32_29 = arith.constant 128 : i32
      %c0_i32_30 = arith.constant 0 : i32
      %67 = arith.cmpi eq, %c128_i32_29, %c0_i32_30 : i32
      %c1_i32_31 = arith.constant 1 : i32
      %68 = arith.select %67, %c1_i32_31, %c128_i32_29 : i32
      %69 = arith.remsi %66, %68 : i32
      %c0_i32_32 = arith.constant 0 : i32
      %70 = arith.cmpi ne, %69, %c0_i32_32 : i32
      %c0_i32_33 = arith.constant 0 : i32
      %71 = arith.cmpi slt, %69, %c0_i32_33 : i32
      %c0_i32_34 = arith.constant 0 : i32
      %72 = arith.cmpi slt, %68, %c0_i32_34 : i32
      %73 = arith.xori %71, %72 : i1
      %74 = arith.andi %73, %70 : i1
      %75 = arith.addi %69, %68 : i32
      %76 = arith.select %74, %75, %69 : i32
      %77 = tpu.dynamic_rotate %38 by %76 dim 1 : vector<8x128xf32>, i32 -> vector<8x128xf32>
      %c0_i32_35 = arith.constant 0 : i32
      %78 = arith.cmpi slt, %30, %c0_i32_35 : i32
      %79 = vector.broadcast %78 : i1 to vector<8x128xi1>
      %80 = arith.andi %79, %7 : vector<8x128xi1>
      %81 = arith.select %80, %77, %65 : vector<8x128xi1>, vector<8x128xf32>
      %c2_i32_36 = arith.constant 2 : i32
      %82 = arith.subi %c2_i32_36, %30 : i32
      %c128_i32_37 = arith.constant 128 : i32
      %c0_i32_38 = arith.constant 0 : i32
      %83 = arith.cmpi eq, %c128_i32_37, %c0_i32_38 : i32
      %c1_i32_39 = arith.constant 1 : i32
      %84 = arith.select %83, %c1_i32_39, %c128_i32_37 : i32
      %85 = arith.remsi %82, %84 : i32
      %c0_i32_40 = arith.constant 0 : i32
      %86 = arith.cmpi ne, %85, %c0_i32_40 : i32
      %c0_i32_41 = arith.constant 0 : i32
      %87 = arith.cmpi slt, %85, %c0_i32_41 : i32
      %c0_i32_42 = arith.constant 0 : i32
      %88 = arith.cmpi slt, %84, %c0_i32_42 : i32
      %89 = arith.xori %87, %88 : i1
      %90 = arith.andi %89, %86 : i1
      %91 = arith.addi %85, %84 : i32
      %92 = arith.select %90, %91, %85 : i32
      %93 = tpu.dynamic_rotate %38 by %92 dim 1 : vector<8x128xf32>, i32 -> vector<8x128xf32>
      %c1_i32_43 = arith.constant 1 : i32
      %94 = arith.cmpi sgt, %30, %c1_i32_43 : i32
      %95 = vector.broadcast %94 : i1 to vector<8x128xi1>
      %96 = arith.andi %95, %5 : vector<8x128xi1>
      %97 = arith.select %96, %93, %81 : vector<8x128xi1>, vector<8x128xf32>
      %c-2_i32 = arith.constant -2 : i32
      %98 = arith.subi %c-2_i32, %30 : i32
      %c128_i32_44 = arith.constant 128 : i32
      %c0_i32_45 = arith.constant 0 : i32
      %99 = arith.cmpi eq, %c128_i32_44, %c0_i32_45 : i32
      %c1_i32_46 = arith.constant 1 : i32
      %100 = arith.select %99, %c1_i32_46, %c128_i32_44 : i32
      %101 = arith.remsi %98, %100 : i32
      %c0_i32_47 = arith.constant 0 : i32
      %102 = arith.cmpi ne, %101, %c0_i32_47 : i32
      %c0_i32_48 = arith.constant 0 : i32
      %103 = arith.cmpi slt, %101, %c0_i32_48 : i32
      %c0_i32_49 = arith.constant 0 : i32
      %104 = arith.cmpi slt, %100, %c0_i32_49 : i32
      %105 = arith.xori %103, %104 : i1
      %106 = arith.andi %105, %102 : i1
      %107 = arith.addi %101, %100 : i32
      %108 = arith.select %106, %107, %101 : i32
      %109 = tpu.dynamic_rotate %38 by %108 dim 1 : vector<8x128xf32>, i32 -> vector<8x128xf32>
      %c-1_i32 = arith.constant -1 : i32
      %110 = arith.cmpi slt, %30, %c-1_i32 : i32
      %111 = vector.broadcast %110 : i1 to vector<8x128xi1>
      %112 = arith.andi %111, %9 : vector<8x128xi1>
      %113 = arith.select %112, %109, %97 : vector<8x128xi1>, vector<8x128xf32>
      %c2_50 = arith.constant 2 : index
      %c0_51 = arith.constant 0 : index
      %c0_52 = arith.constant 0 : index
      %114 = vector.load %arg4[%c2_50, %c0_51, %c0_52] : memref<3x8x128xf32, #tpu.memory_space<vmem>>, vector<1x8x128xf32>
      %115 = vector.shape_cast %114 : vector<1x8x128xf32> to vector<8x128xf32>
      %116 = vector.shape_cast %113 : vector<8x128xf32> to vector<1x8x128xf32>
      tpu.vector_store %arg4[%c2_50, %c0_51, %c0_52], %116 {strides = array<i32>} : memref<3x8x128xf32, #tpu.memory_space<vmem>>, vector<1x8x128xf32>,
    } else {
    }
    return
  }
  func.func @transform_0(%arg0: i32, %arg1: i32, %arg2: memref<6xi32, #tpu.memory_space<smem>>) -> (i32, i32, i32) {
    %c0_i32 = arith.constant 0 : i32
    %c0_i32_0 = arith.constant 0 : i32
    return %arg0, %arg1, %c0_i32 : i32, i32, i32
  }
  func.func @transform_1(%arg0: i32, %arg1: i32, %arg2: memref<6xi32, #tpu.memory_space<smem>>) -> (i32, i32, i32) {
    %c0_i32 = arith.constant 0 : i32
    %c0_i32_0 = arith.constant 0 : i32
    return %arg0, %arg1, %c0_i32 : i32, i32, i32
  }
}

</mosaic_0001>

<llo_original>
// kernel: tpu_custom_call.1
$region0: #{tpu_custom_call.1}
  #allocation0 [shape = 'u32[]', space=smem, size = 0x4, offset = 0x4, fixed_abs, tag = 'smem constant byte address 0x4 - core index']
  #allocation1 [shape = 'u32[144,128]{1,0:T(1,128)}', space=vmem, size = 0x12000, scoped, tag = 'internal scratch']
  #allocation2 [shape = 's32[1]{0}', space=sflag, size = 0x4, scoped, tag = 'scoped memory for tpu_custom_call.1']
  #allocation3 [shape = 'u8[512]{0}', space=smem, size = 0x200, scoped, tag = 'prefetched SMEM operand 0']
  %s0 = inlined_call_operand.hbm [shape: s32[6], index: 0, kind: input, shape index: {}]
  %s1 = inlined_call_operand.hbm [shape: f32[6,8,128], index: 1, kind: input, shape index: {}]
  %s2 = inlined_call_operand.hbm [shape: f32[6,8,128], index: 2, kind: output, shape index: {}]
  %s3 = sld [smem:[#allocation0]]
  $region65: #{tpu_custom_call.1} parent=0
    _
  %s5 = ssub.s32 1, %s3
  %s6 = scalar_select 0, %s5, %s3
  %8 = dma.hbm_to_smem %s0, 16, [#allocation3], [#allocation2]
  %9 = dma.done [#allocation2], 16
  %10 = sfence
  $region1: #{tpu_custom_call.1} parent=0
    #allocation4 [shape = 'u8[24576]{0}', space=vmem, size = 0x6000, scoped, tag = 'input window, operand 1']
    #allocation5 [shape = 's32[2]{0}', space=sflag, size = 0x8, scoped, tag = 'scoped memory for tpu_custom_call.1']
    #allocation6 [shape = 's32[2]{0}', space=sflag, size = 0x8, scoped, tag = 'scoped memory for tpu_custom_call.1']
    #allocation7 [shape = 'u8[24576]{0}', space=vmem, size = 0x6000, scoped, tag = 'output window, operand 0']
    %11 = vsyncpa [#allocation5], 0
    %s12 = scalar_lea.sflag [#allocation5], 1
    %13 = vsyncpa %s12, 0
    %14 = vsyncpa [#allocation6], 0
    %s15 = scalar_lea.sflag [#allocation6], 1
    %16 = vsyncpa %s15, 0
    loop: start=0, step=1, limit=4
    $region2: #{tpu_custom_call.1} parent=1 // loop_pre_header
      _
    $region3: #{tpu_custom_call.1} parent=1 // loop_header
      %s18 = sphi 0, %s22
      %p19 = scmp.ge.s32.totalorder %s18, 4
      %s25 = sphi 0, %s37
      %s26 = sphi 0, %s33
      %s27 = sphi 0, %s25
      %s28 = sphi 0, %s26
      %s29 = sphi 0, %s27
      %s30 = sphi 0, %s28
      %s42 = sphi 0, %s44
      %s45 = sphi 0, %s42
      %s46 = sphi 0, %s45
      %s62 = sphi 0, %s46
      %s70 = sphi 0, %s72
      %s73 = sphi 0, %s70
      %s74 = sphi 0, %s73
      %s90 = sphi 0, %s74
    $region4: #{tpu_custom_call.1} parent=1 // loop_header_branch
      %21 = sbr.rel (%p19) target = $region8
    $region5: #{tpu_custom_call.1} parent=1 // loop_body
      %s23 = ssub.s32 %s18, 1
      %s24 = ssub.s32 %s18, 2
      %s31 = sadd.s32 1, %s26
      %p32 = scmp.ge.s32.totalorder %s31, 1
      %s33 = scalar_select %p32, 0, %s31
      %s34 = sadd.s32 1, %s25
      %s35 = scalar_select %p32, %s34, %s25
      %p36 = scmp.ge.s32.totalorder %s35, 2
      %s37 = scalar_select %p36, 0, %s35
      %s38 = ssub.s32 %s25, %s37
      %s39 = ssub.s32 %s26, %s33
      %s40 = sor.u32 %s38, %s39
      %p41 = scmp.eq.s32.totalorder %s40, 0
      %s43 = sadd.s32 %s42, 1
      %s44 = scalar_select %p41, %s42, %s43
      %p47 = pneg %p41
      %p48 = scmp.eq.s32.totalorder %s18, 1
      %p49 = por %p47, %p48
      %p50 = scmp.ne.s32.totalorder %s42, %s45
      %p51 = scmp.eq.s32.totalorder %s18, 0
      %p52 = por %p50, %p51
      %p53 = scmp.ne.s32.totalorder %s42, %s45
      %p54 = scmp.eq.s32.totalorder %s23, 1
      %p55 = por %p53, %p54
      %p56 = scmp.ne.s32.totalorder %s45, %s46
      %p57 = scmp.eq.s32.totalorder %s23, 0
      %p58 = por %p56, %p57
      %p59 = scmp.ne.s32.totalorder %s45, %s46
      %p60 = scmp.eq.s32.totalorder %s24, 1
      %p61 = por %p59, %p60
      %p63 = scmp.ne.s32.totalorder %s46, %s62
      %p64 = scmp.eq.s32.totalorder %s24, 0
      %p65 = por %p63, %p64
      %s66 = ssub.s32 %s25, %s37
      %s67 = ssub.s32 %s26, %s33
      %s68 = sor.u32 %s66, %s67
      %p69 = scmp.eq.s32.totalorder %s68, 0
      %s71 = sadd.s32 %s70, 1
      %s72 = scalar_select %p69, %s70, %s71
      %p75 = pneg %p69
      %p76 = scmp.eq.s32.totalorder %s18, 1
      %p77 = por %p75, %p76
      %p78 = scmp.ne.s32.totalorder %s70, %s73
      %p79 = scmp.eq.s32.totalorder %s18, 0
      %p80 = por %p78, %p79
      %p81 = scmp.ne.s32.totalorder %s70, %s73
      %p82 = scmp.eq.s32.totalorder %s23, 1
      %p83 = por %p81, %p82
      %p84 = scmp.ne.s32.totalorder %s73, %s74
      %p85 = scmp.eq.s32.totalorder %s23, 0
      %p86 = por %p84, %p85
      %p87 = scmp.ne.s32.totalorder %s73, %s74
      %p88 = scmp.eq.s32.totalorder %s24, 1
      %p89 = por %p87, %p88
      %p91 = scmp.ne.s32.totalorder %s74, %s90
      %p92 = scmp.eq.s32.totalorder %s24, 0
      %p93 = por %p91, %p92
      %p94 = scmp.le.s32.totalorder 1, %s18
      %p95 = scmp.lt.s32.totalorder %s18, 3
      %p96 = pnand %p94, %p95
      %p97 = pneg %p96
      // Predicated region
      $region9: #{tpu_custom_call.1} parent=5 // pred_check
        _
      $region10: #{tpu_custom_call.1} parent=5 // pred_check_branch
        %99 = sbr.rel (%p96) target = $region12
      $region11: #{tpu_custom_call.1} parent=5 // pred_region
        %s100 = ssub.s32 %s18, 1
      $region12: #{tpu_custom_call.1} parent=5 // pred_fallthru
        _
      %p101 = scmp.lt.s32.totalorder %s18, 2
      // Predicated region
      $region13: #{tpu_custom_call.1} parent=5 // pred_check
        %p102 = pneg %p101
      $region14: #{tpu_custom_call.1} parent=5 // pred_check_branch
        %104 = sbr.rel (%p102) target = $region16
      $region15: #{tpu_custom_call.1} parent=5 // pred_region
        // Predicated region
        $region17: #{tpu_custom_call.1} parent=15 // pred_check
          %p105 = pneg %p52
        $region18: #{tpu_custom_call.1} parent=15 // pred_check_branch
          %107 = sbr.rel (%p105) target = $region20
        $region19: #{tpu_custom_call.1} parent=15 // pred_region
          %s108 = sand.u32 %s42, 1
          %s109 = scalar_lea.sflag [#allocation5], %s108
          %s110 = sand.u32 %s42, 1
          %s111 = smul.addr %s110, 24
          %s112 = scalar_lea.vmem [#allocation4], %s111
          %s113 = smul.u32 3, %s25
          %s115 = ssub.s32 384, 384
          %116 = vsyncadd %s109, %s115
          %s117 = sadd.s32 %s26, %s113
          %s118 = smul.addr %s117, 128
          %s119 = scalar_lea.hbm %s1, %s118
          %s120 = sshll.u32 %s112, 4
          %s121 = int_to_ptr.vmem [resolvable:$true] %s120
          %126 = dma.hbm_to_vmem [thread:$0]  %s119, 384, %s121, %s109, 128, 128, 8
        $region20: #{tpu_custom_call.1} parent=15 // pred_fallthru
          _
      $region16: #{tpu_custom_call.1} parent=5 // pred_fallthru
        _
      %p127 = scmp.le.s32.totalorder 1, %s18
      %p128 = scmp.lt.s32.totalorder %s18, 3
      %p129 = pnand %p127, %p128
      %p130 = pneg %p129
      // Predicated region
      $region21: #{tpu_custom_call.1} parent=5 // pred_check
        _
      $region22: #{tpu_custom_call.1} parent=5 // pred_check_branch
        %132 = sbr.rel (%p129) target = $region24
      $region23: #{tpu_custom_call.1} parent=5 // pred_region
        %s133 = ssub.s32 %s18, 1
        %s134 = sand.u32 %s45, 1
        %s135 = scalar_lea.sflag [#allocation5], %s134
        %s136 = sand.u32 %s45, 1
        %s137 = smul.addr %s136, 24
        %s138 = scalar_lea.vmem [#allocation4], %s137
        // Predicated region
        $region25: #{tpu_custom_call.1} parent=23 // pred_check
          %p139 = pneg %p58
        $region26: #{tpu_custom_call.1} parent=23 // pred_check_branch
          %141 = sbr.rel (%p139) target = $region28
        $region27: #{tpu_custom_call.1} parent=23 // pred_region
          %142 = dma.done %s135, 384
        $region28: #{tpu_custom_call.1} parent=23 // pred_fallthru
          _
        %s143 = sand.u32 %s45, 1
        %s144 = scalar_lea.sflag [#allocation5], %s143
        %s145 = sand.u32 %s45, 1
        %s146 = smul.addr %s145, 24
        %s147 = scalar_lea.vmem [#allocation4], %s146
        %p148 = pneg %p58
        %p149 = pneg %p55
        %p150 = pneg %p86
        %p151 = pneg %p83
        %s152 = sand.u32 %s73, 1
        %s153 = scalar_lea.sflag [#allocation6], %s152
        %s154 = sand.u32 %s73, 1
        %s155 = smul.addr %s154, 24
        %s156 = scalar_lea.vmem [#allocation7], %s155
        %s157 = smul.u32 3, %s27
        %s158 = smul.u32 3, %s27
        %s159 = smul.u32 %s27, 3
        %v160 = vlaneseq
        %v161 = vand.u32 %v160, 127
        %vm162 = vcmp.eq.s32.totalorder %v161, 0
        %vm163 = vcmp.eq.s32.totalorder %v161, 1
        %vm164 = vcmp.eq.s32.totalorder %v161, 127
        %vm165 = vcmp.eq.s32.totalorder %v161, 126
        %s166 = sld [smem:[#allocation3 + %s159]]
        %p167 = scmp.eq.s32.totalorder %s166, 0
        // Predicated region
        $region29: #{tpu_custom_call.1} parent=23 // pred_check
          %p168 = pneg %p167
        $region30: #{tpu_custom_call.1} parent=23 // pred_check_branch
          %170 = sbr.rel (%p168) target = $region32
        $region31: #{tpu_custom_call.1} parent=23 // pred_region
          %v171 = vld [vmem:[%s138] sm:$0xff]
          %172 = vst [vmem:[%s156] sm:$0xff] %v171
        $region32: #{tpu_custom_call.1} parent=23 // pred_fallthru
          _
        %p173 = scmp.ne.s32.totalorder %s166, 0
        // Predicated region
        $region33: #{tpu_custom_call.1} parent=23 // pred_check
          %p174 = pneg %p173
        $region34: #{tpu_custom_call.1} parent=23 // pred_check_branch
          %176 = sbr.rel (%p174) target = $region36
        $region35: #{tpu_custom_call.1} parent=23 // pred_region
          %v177 = vld [vmem:[%s138] sm:$0xff]
          %p178 = scmp.lt.s32.totalorder %s166, 0
          %s179 = ssub.s32 0, %s166
          %s180 = scalar_select %p178, %s179, %s166
          %s181 = sand.u32 %s180, 127
          %s182 = ssub.s32 0, %s181
          %s183 = scalar_select %p178, %s182, %s181
          %p184 = scmp.ne.s32.totalorder %s183, 0
          %p185 = scmp.lt.s32.totalorder %s183, 0
          %p186 = pnand %p185, %p184
          %p187 = pneg %p186
          %s188 = sadd.s32 %s183, 128
          %s189 = scalar_select %p187, %s188, %s183
          %s190 = sand.u32 %s189, 127
          %s191 = sand.u32 %s190, 127
          %192 = vrot.lane.b32.xlu0 %v177, %s191
          %v193 = vpop.permute.xlu0 %192
          %s194 = ssub.s32 0, %s166
          %p195 = scmp.lt.s32.totalorder %s194, 0
          %s196 = ssub.s32 0, %s194
          %s197 = scalar_select %p195, %s196, %s194
          %s198 = sand.u32 %s197, 127
          %s199 = ssub.s32 0, %s198
          %s200 = scalar_select %p195, %s199, %s198
          %p201 = scmp.ne.s32.totalorder %s200, 0
          %p202 = scmp.lt.s32.totalorder %s200, 0
          %p203 = pnand %p202, %p201
          %p204 = pneg %p203
          %s205 = sadd.s32 %s200, 128
          %s206 = scalar_select %p204, %s205, %s200
          %s207 = sand.u32 %s206, 127
          %s208 = sand.u32 %s207, 127
          %209 = vrot.lane.b32.xlu0 %v177, %s208
          %v210 = vpop.permute.xlu0 %209
          %p211 = scmp.gt.s32.totalorder %s166, 0
          %s212 = scalar_select %p211, 1, 0
          %v213 = vstv %s212
          %vm214 = vcmp.eq.s32.totalorder %v213, 1
          %vm215 = vmand %vm214, %vm162
          %v216 = vsel %vm215, %v210, %v193
          %p217 = scmp.lt.s32.totalorder %s166, 0
          %s218 = scalar_select %p217, 1, 0
          %v219 = vstv %s218
          %vm220 = vcmp.eq.s32.totalorder %v219, 1
          %vm221 = vmand %vm220, %vm164
          %v222 = vsel %vm221, %v210, %v216
          %s223 = ssub.s32 2, %s166
          %p224 = scmp.lt.s32.totalorder %s223, 0
          %s225 = ssub.s32 0, %s223
          %s226 = scalar_select %p224, %s225, %s223
          %s227 = sand.u32 %s226, 127
          %s228 = ssub.s32 0, %s227
          %s229 = scalar_select %p224, %s228, %s227
          %p230 = scmp.ne.s32.totalorder %s229, 0
          %p231 = scmp.lt.s32.totalorder %s229, 0
          %p232 = pnand %p231, %p230
          %p233 = pneg %p232
          %s234 = sadd.s32 %s229, 128
          %s235 = scalar_select %p233, %s234, %s229
          %s236 = sand.u32 %s235, 127
          %s237 = sand.u32 %s236, 127
          %238 = vrot.lane.b32.xlu0 %v177, %s237
          %v239 = vpop.permute.xlu0 %238
          %p240 = scmp.gt.s32.totalorder %s166, 1
          %s241 = scalar_select %p240, 1, 0
          %v242 = vstv %s241
          %vm243 = vcmp.eq.s32.totalorder %v242, 1
          %vm244 = vmand %vm243, %vm163
          %v245 = vsel %vm244, %v239, %v222
          %s246 = ssub.s32 4294967294, %s166
          %p247 = scmp.lt.s32.totalorder %s246, 0
          %s248 = ssub.s32 0, %s246
          %s249 = scalar_select %p247, %s248, %s246
          %s250 = sand.u32 %s249, 127
          %s251 = ssub.s32 0, %s250
          %s252 = scalar_select %p247, %s251, %s250
          %p253 = scmp.ne.s32.totalorder %s252, 0
          %p254 = scmp.lt.s32.totalorder %s252, 0
          %p255 = pnand %p254, %p253
          %p256 = pneg %p255
          %s257 = sadd.s32 %s252, 128
          %s258 = scalar_select %p256, %s257, %s252
          %s259 = sand.u32 %s258, 127
          %s260 = sand.u32 %s259, 127
          %261 = vrot.lane.b32.xlu0 %v177, %s260
          %v262 = vpop.permute.xlu0 %261
          %p263 = scmp.lt.s32.totalorder %s166, 4294967295
          %s264 = scalar_select %p263, 1, 0
          %v265 = vstv %s264
          %vm266 = vcmp.eq.s32.totalorder %v265, 1
          %vm267 = vmand %vm266, %vm165
          %v268 = vsel %vm267, %v262, %v245
          %269 = vst [vmem:[%s156] sm:$0xff] %v268
        $region36: #{tpu_custom_call.1} parent=23 // pred_fallthru
          _
        %s270 = sadd.s32 %s159, 1
        %s271 = sld [smem:[#allocation3 + %s270]]
        %p272 = scmp.eq.s32.totalorder %s271, 0
        // Predicated region
        $region37: #{tpu_custom_call.1} parent=23 // pred_check
          %p273 = pneg %p272
        $region38: #{tpu_custom_call.1} parent=23 // pred_check_branch
          %275 = sbr.rel (%p273) target = $region40
        $region39: #{tpu_custom_call.1} parent=23 // pred_region
          %s276 = scalar_lea.vmem %s138, 8 [#allocation4]
          %v277 = vld [vmem:[%s276] sm:$0xff]
          %s278 = scalar_lea.vmem %s156, 8 [#allocation7]
          %279 = vst [vmem:[%s278] sm:$0xff] %v277
        $region40: #{tpu_custom_call.1} parent=23 // pred_fallthru
          _
        %p280 = scmp.ne.s32.totalorder %s271, 0
        // Predicated region
        $region41: #{tpu_custom_call.1} parent=23 // pred_check
          %p281 = pneg %p280
        $region42: #{tpu_custom_call.1} parent=23 // pred_check_branch
          %283 = sbr.rel (%p281) target = $region44
        $region43: #{tpu_custom_call.1} parent=23 // pred_region
          %s284 = scalar_lea.vmem %s138, 8 [#allocation4]
          %v285 = vld [vmem:[%s284] sm:$0xff]
          %p286 = scmp.lt.s32.totalorder %s271, 0
          %s287 = ssub.s32 0, %s271
          %s288 = scalar_select %p286, %s287, %s271
          %s289 = sand.u32 %s288, 127
          %s290 = ssub.s32 0, %s289
          %s291 = scalar_select %p286, %s290, %s289
          %p292 = scmp.ne.s32.totalorder %s291, 0
          %p293 = scmp.lt.s32.totalorder %s291, 0
          %p294 = pnand %p293, %p292
          %p295 = pneg %p294
          %s296 = sadd.s32 %s291, 128
          %s297 = scalar_select %p295, %s296, %s291
          %s298 = sand.u32 %s297, 127
          %s299 = sand.u32 %s298, 127
          %300 = vrot.lane.b32.xlu0 %v285, %s299
          %v301 = vpop.permute.xlu0 %300
          %s302 = ssub.s32 0, %s271
          %p303 = scmp.lt.s32.totalorder %s302, 0
          %s304 = ssub.s32 0, %s302
          %s305 = scalar_select %p303, %s304, %s302
          %s306 = sand.u32 %s305, 127
          %s307 = ssub.s32 0, %s306
          %s308 = scalar_select %p303, %s307, %s306
          %p309 = scmp.ne.s32.totalorder %s308, 0
          %p310 = scmp.lt.s32.totalorder %s308, 0
          %p311 = pnand %p310, %p309
          %p312 = pneg %p311
          %s313 = sadd.s32 %s308, 128
          %s314 = scalar_select %p312, %s313, %s308
          %s315 = sand.u32 %s314, 127
          %s316 = sand.u32 %s315, 127
          %317 = vrot.lane.b32.xlu0 %v285, %s316
          %v318 = vpop.permute.xlu0 %317
          %p319 = scmp.gt.s32.totalorder %s271, 0
          %s320 = scalar_select %p319, 1, 0
          %v321 = vstv %s320
          %vm322 = vcmp.eq.s32.totalorder %v321, 1
          %vm323 = vmand %vm322, %vm162
          %v324 = vsel %vm323, %v318, %v301
          %p325 = scmp.lt.s32.totalorder %s271, 0
          %s326 = scalar_select %p325, 1, 0
          %v327 = vstv %s326
          %vm328 = vcmp.eq.s32.totalorder %v327, 1
          %vm329 = vmand %vm328, %vm164
          %v330 = vsel %vm329, %v318, %v324
          %s331 = ssub.s32 2, %s271
          %p332 = scmp.lt.s32.totalorder %s331, 0
          %s333 = ssub.s32 0, %s331
          %s334 = scalar_select %p332, %s333, %s331
          %s335 = sand.u32 %s334, 127
          %s336 = ssub.s32 0, %s335
          %s337 = scalar_select %p332, %s336, %s335
          %p338 = scmp.ne.s32.totalorder %s337, 0
          %p339 = scmp.lt.s32.totalorder %s337, 0
          %p340 = pnand %p339, %p338
          %p341 = pneg %p340
          %s342 = sadd.s32 %s337, 128
          %s343 = scalar_select %p341, %s342, %s337
          %s344 = sand.u32 %s343, 127
          %s345 = sand.u32 %s344, 127
          %346 = vrot.lane.b32.xlu0 %v285, %s345
          %v347 = vpop.permute.xlu0 %346
          %p348 = scmp.gt.s32.totalorder %s271, 1
          %s349 = scalar_select %p348, 1, 0
          %v350 = vstv %s349
          %vm351 = vcmp.eq.s32.totalorder %v350, 1
          %vm352 = vmand %vm351, %vm163
          %v353 = vsel %vm352, %v347, %v330
          %s354 = ssub.s32 4294967294, %s271
          %p355 = scmp.lt.s32.totalorder %s354, 0
          %s356 = ssub.s32 0, %s354
          %s357 = scalar_select %p355, %s356, %s354
          %s358 = sand.u32 %s357, 127
          %s359 = ssub.s32 0, %s358
          %s360 = scalar_select %p355, %s359, %s358
          %p361 = scmp.ne.s32.totalorder %s360, 0
          %p362 = scmp.lt.s32.totalorder %s360, 0
          %p363 = pnand %p362, %p361
          %p364 = pneg %p363
          %s365 = sadd.s32 %s360, 128
          %s366 = scalar_select %p364, %s365, %s360
          %s367 = sand.u32 %s366, 127
          %s368 = sand.u32 %s367, 127
          %369 = vrot.lane.b32.xlu0 %v285, %s368
          %v370 = vpop.permute.xlu0 %369
          %p371 = scmp.lt.s32.totalorder %s271, 4294967295
          %s372 = scalar_select %p371, 1, 0
          %v373 = vstv %s372
          %vm374 = vcmp.eq.s32.totalorder %v373, 1
          %vm375 = vmand %vm374, %vm165
          %v376 = vsel %vm375, %v370, %v353
          %s377 = scalar_lea.vmem %s156, 8 [#allocation7]
          %378 = vst [vmem:[%s377] sm:$0xff] %v376
        $region44: #{tpu_custom_call.1} parent=23 // pred_fallthru
          _
        %s379 = sadd.s32 %s159, 2
        %s380 = sld [smem:[#allocation3 + %s379]]
        %p381 = scmp.eq.s32.totalorder %s380, 0
        // Predicated region
        $region45: #{tpu_custom_call.1} parent=23 // pred_check
          %p382 = pneg %p381
        $region46: #{tpu_custom_call.1} parent=23 // pred_check_branch
          %384 = sbr.rel (%p382) target = $region48
        $region47: #{tpu_custom_call.1} parent=23 // pred_region
          %s385 = scalar_lea.vmem %s138, 16 [#allocation4]
          %v386 = vld [vmem:[%s385] sm:$0xff]
          %s387 = scalar_lea.vmem %s156, 16 [#allocation7]
          %388 = vst [vmem:[%s387] sm:$0xff] %v386
        $region48: #{tpu_custom_call.1} parent=23 // pred_fallthru
          _
        %p389 = scmp.ne.s32.totalorder %s380, 0
        // Predicated region
        $region49: #{tpu_custom_call.1} parent=23 // pred_check
          %p390 = pneg %p389
        $region50: #{tpu_custom_call.1} parent=23 // pred_check_branch
          %392 = sbr.rel (%p390) target = $region52
        $region51: #{tpu_custom_call.1} parent=23 // pred_region
          %s393 = scalar_lea.vmem %s138, 16 [#allocation4]
          %v394 = vld [vmem:[%s393] sm:$0xff]
          %p395 = scmp.lt.s32.totalorder %s380, 0
          %s396 = ssub.s32 0, %s380
          %s397 = scalar_select %p395, %s396, %s380
          %s398 = sand.u32 %s397, 127
          %s399 = ssub.s32 0, %s398
          %s400 = scalar_select %p395, %s399, %s398
          %p401 = scmp.ne.s32.totalorder %s400, 0
          %p402 = scmp.lt.s32.totalorder %s400, 0
          %p403 = pnand %p402, %p401
          %p404 = pneg %p403
          %s405 = sadd.s32 %s400, 128
          %s406 = scalar_select %p404, %s405, %s400
          %s407 = sand.u32 %s406, 127
          %s408 = sand.u32 %s407, 127
          %409 = vrot.lane.b32.xlu0 %v394, %s408
          %v410 = vpop.permute.xlu0 %409
          %s411 = ssub.s32 0, %s380
          %p412 = scmp.lt.s32.totalorder %s411, 0
          %s413 = ssub.s32 0, %s411
          %s414 = scalar_select %p412, %s413, %s411
          %s415 = sand.u32 %s414, 127
          %s416 = ssub.s32 0, %s415
          %s417 = scalar_select %p412, %s416, %s415
          %p418 = scmp.ne.s32.totalorder %s417, 0
          %p419 = scmp.lt.s32.totalorder %s417, 0
          %p420 = pnand %p419, %p418
          %p421 = pneg %p420
          %s422 = sadd.s32 %s417, 128
          %s423 = scalar_select %p421, %s422, %s417
          %s424 = sand.u32 %s423, 127
          %s425 = sand.u32 %s424, 127
          %426 = vrot.lane.b32.xlu0 %v394, %s425
          %v427 = vpop.permute.xlu0 %426
          %p428 = scmp.gt.s32.totalorder %s380, 0
          %s429 = scalar_select %p428, 1, 0
          %v430 = vstv %s429
          %vm431 = vcmp.eq.s32.totalorder %v430, 1
          %vm432 = vmand %vm431, %vm162
          %v433 = vsel %vm432, %v427, %v410
          %p434 = scmp.lt.s32.totalorder %s380, 0
          %s435 = scalar_select %p434, 1, 0
          %v436 = vstv %s435
          %vm437 = vcmp.eq.s32.totalorder %v436, 1
          %vm438 = vmand %vm437, %vm164
          %v439 = vsel %vm438, %v427, %v433
          %s440 = ssub.s32 2, %s380
          %p441 = scmp.lt.s32.totalorder %s440, 0
          %s442 = ssub.s32 0, %s440
          %s443 = scalar_select %p441, %s442, %s440
          %s444 = sand.u32 %s443, 127
          %s445 = ssub.s32 0, %s444
          %s446 = scalar_select %p441, %s445, %s444
          %p447 = scmp.ne.s32.totalorder %s446, 0
          %p448 = scmp.lt.s32.totalorder %s446, 0
          %p449 = pnand %p448, %p447
          %p450 = pneg %p449
          %s451 = sadd.s32 %s446, 128
          %s452 = scalar_select %p450, %s451, %s446
          %s453 = sand.u32 %s452, 127
          %s454 = sand.u32 %s453, 127
          %455 = vrot.lane.b32.xlu0 %v394, %s454
          %v456 = vpop.permute.xlu0 %455
          %p457 = scmp.gt.s32.totalorder %s380, 1
          %s458 = scalar_select %p457, 1, 0
          %v459 = vstv %s458
          %vm460 = vcmp.eq.s32.totalorder %v459, 1
          %vm461 = vmand %vm460, %vm163
          %v462 = vsel %vm461, %v456, %v439
          %s463 = ssub.s32 4294967294, %s380
          %p464 = scmp.lt.s32.totalorder %s463, 0
          %s465 = ssub.s32 0, %s463
          %s466 = scalar_select %p464, %s465, %s463
          %s467 = sand.u32 %s466, 127
          %s468 = ssub.s32 0, %s467
          %s469 = scalar_select %p464, %s468, %s467
          %p470 = scmp.ne.s32.totalorder %s469, 0
          %p471 = scmp.lt.s32.totalorder %s469, 0
          %p472 = pnand %p471, %p470
          %p473 = pneg %p472
          %s474 = sadd.s32 %s469, 128
          %s475 = scalar_select %p473, %s474, %s469
          %s476 = sand.u32 %s475, 127
          %s477 = sand.u32 %s476, 127
          %478 = vrot.lane.b32.xlu0 %v394, %s477
          %v479 = vpop.permute.xlu0 %478
          %p480 = scmp.lt.s32.totalorder %s380, 4294967295
          %s481 = scalar_select %p480, 1, 0
          %v482 = vstv %s481
          %vm483 = vcmp.eq.s32.totalorder %v482, 1
          %vm484 = vmand %vm483, %vm165
          %v485 = vsel %vm484, %v479, %v462
          %s486 = scalar_lea.vmem %s156, 16 [#allocation7]
          %487 = vst [vmem:[%s486] sm:$0xff] %v485
        $region52: #{tpu_custom_call.1} parent=23 // pred_fallthru
          _
        %s488 = sand.u32 %s73, 1
        %s489 = scalar_lea.sflag [#allocation6], %s488
        %s490 = sand.u32 %s73, 1
        %s491 = smul.addr %s490, 24
        %s492 = scalar_lea.vmem [#allocation7], %s491
        // Predicated region
        $region53: #{tpu_custom_call.1} parent=23 // pred_check
          %p493 = pneg %p83
        $region54: #{tpu_custom_call.1} parent=23 // pred_check_branch
          %495 = sbr.rel (%p493) target = $region56
        $region55: #{tpu_custom_call.1} parent=23 // pred_region
          %s496 = smul.u32 3, %s27
          %s498 = ssub.s32 384, 384
          %499 = vsyncadd %s489, %s498
          %s500 = sadd.s32 %s28, %s496
          %s501 = smul.addr %s500, 128
          %s502 = scalar_lea.hbm %s2, %s501
          %s503 = sshll.u32 %s492, 4
          %s504 = int_to_ptr.vmem [resolvable:$true] %s503
          %509 = dma.vmem_to_hbm [thread:$0]  %s504, 384, %s502, %s489, 128, 128, 8
        $region56: #{tpu_custom_call.1} parent=23 // pred_fallthru
          _
      $region24: #{tpu_custom_call.1} parent=5 // pred_fallthru
        _
      %p510 = scmp.le.s32.totalorder 2, %s18
      // Predicated region
      $region57: #{tpu_custom_call.1} parent=5 // pred_check
        %p511 = pneg %p510
      $region58: #{tpu_custom_call.1} parent=5 // pred_check_branch
        %513 = sbr.rel (%p511) target = $region60
      $region59: #{tpu_custom_call.1} parent=5 // pred_region
        %s514 = ssub.s32 %s18, 2
        // Predicated region
        $region61: #{tpu_custom_call.1} parent=59 // pred_check
          %p515 = pneg %p89
        $region62: #{tpu_custom_call.1} parent=59 // pred_check_branch
          %517 = sbr.rel (%p515) target = $region64
        $region63: #{tpu_custom_call.1} parent=59 // pred_region
          %s518 = sand.u32 %s74, 1
          %s519 = scalar_lea.sflag [#allocation6], %s518
          %s520 = sand.u32 %s74, 1
          %s521 = smul.addr %s520, 24
          %s522 = scalar_lea.vmem [#allocation7], %s521
          %523 = dma.done %s519, 384
        $region64: #{tpu_custom_call.1} parent=59 // pred_fallthru
          _
      $region60: #{tpu_custom_call.1} parent=5 // pred_fallthru
        _
    $region6: #{tpu_custom_call.1} parent=1 // loop_footer
      %s22 = sadd.s32 1, %s18
    $region7: #{tpu_custom_call.1} parent=1 // loop_footer_branch
      %17 = sbr.rel target = $region3
    $region8: #{tpu_custom_call.1} parent=1 // loop_exit
      _
    %524 = vsyncpa [#allocation5], 1
    %s525 = scalar_lea.sflag [#allocation5], 1
    %526 = vsyncpa %s525, 1
    %527 = vsyncpa [#allocation6], 1
    %s528 = scalar_lea.sflag [#allocation6], 1
    %529 = vsyncpa %s528, 1

</llo_original>
